<compile_context>
chip_gen: v7x
topology: tpu7x:2x2x1
jax: 0.10.0
libtpu: 0.0.40
codegen_flags: <defaults>
</compile_context>

<pallas_src>
import functools

import jax
import jax.numpy as jnp
from jax.experimental import pallas as pl
from jax.experimental.pallas import tpu as pltpu


def _label_smoothing_kernel(pred_ref, tgt_ref, out_ref, *, n_total, classes,
                            smoothing, tile_n, tile_c, ragged_rows, ragged_cols):
    """One (row-tile, class-tile) grid step.

    pred_ref : (tile_n, tile_c) block of log-probs (any float dtype; upcast here)
    tgt_ref  : (tile_n, 1) int32 block of target class ids
    out_ref  : (8, 128) f32 per-row-tile partial-sum block (resident across j)
    """
    i = pl.program_id(0)      # row-tile index (parallel)
    j = pl.program_id(1)      # class-tile index (reduction, innermost)

    # The per-row-tile accumulator lives in the resident output block; zero it
    # at the first class tile of every row tile.
    @pl.when(j == 0)
    def _init():
        out_ref[...] = jnp.zeros_like(out_ref)

    pred = pred_ref[...].astype(jnp.float32)      # (tile_n, tile_c)
    tgt = tgt_ref[...]                            # (tile_n, 1) int32

    confidence = 1.0 - smoothing
    smooth_val = smoothing / (classes - 1)

    def accumulate(pred_tile):
        # Algebraic form of sum_c(true_dist * pred) for this tile:
        #   smooth_val * sum(pred) + (confidence - smooth_val) * pred[target]
        # Local lane iota compared against the *shifted* target -> no full-tile
        # `+ j * tile_c` add in the steady-state loop.
        col = jax.lax.broadcasted_iota(jnp.int32, (tile_n, tile_c), 1)
        hit = jnp.where(col == (tgt - j * tile_c), pred_tile, 0.0)
        partial = (smooth_val * jnp.sum(pred_tile)
                   + (confidence - smooth_val) * jnp.sum(hit))
        out_ref[0:1, 0:1] += partial

    def mask_edges(pred_tile):
        # Select-based masking (safe even if padded rows/cols contain NaN).
        # Bound checks use scalar right-hand sides only.
        valid = None
        if ragged_rows:
            row = jax.lax.broadcasted_iota(jnp.int32, (tile_n, 1), 0)
            valid = row < (n_total - i * tile_n)
        if ragged_cols:
            col = jax.lax.broadcasted_iota(jnp.int32, (tile_n, tile_c), 1)
            col_ok = col < (classes - j * tile_c)
            valid = col_ok if valid is None else (valid & col_ok)
        return jnp.where(valid, pred_tile, 0.0)

    if not (ragged_rows or ragged_cols):
        # Statically mask-free: every tile is fully in bounds.
        accumulate(pred)
    else:
        conds = []
        if ragged_rows:
            conds.append(i == pl.num_programs(0) - 1)
        if ragged_cols:
            conds.append(j == pl.num_programs(1) - 1)
        is_edge = conds[0]
        for cnd in conds[1:]:
            is_edge = jnp.logical_or(is_edge, cnd)

        @pl.when(jnp.logical_not(is_edge))
        def _interior():
            accumulate(pred)

        @pl.when(is_edge)
        def _edge():
            accumulate(mask_edges(pred))


def label_smoothing_loss(pred, target, *, classes, smoothing=0.0,
                         tile_n=None, tile_c=None):
    """pred: (N, C) float (log Taylor-softmax already applied), target: (N,) int.

    Feed `pred` as bfloat16 when possible: the kernel is HBM-bandwidth-bound and
    upcasts to f32 internally, so bf16 input roughly halves wall-clock.
    """
    n, c = pred.shape
    assert c == classes
    assert classes > 1, "smoothing / (classes - 1) is undefined for classes == 1"

    # Tile sizing: large tiles amortize the ~0.35us/step overhead and reach the
    # HBM roofline; 512x4096 f32 is 8 MiB/buffer (16 MiB double-buffered), well
    # under the explicit 48 MiB vmem limit (safe on v7x's 64 MiB physical VMEM).
    if tile_n is None:
        tile_n = min(512, (n // 8) * 8) if n >= 8 else n
    if tile_c is None:
        tile_c = min(4096, (c // 128) * 128) if c >= 128 else c
    assert 0 < tile_n <= n and 0 < tile_c <= c
    assert tile_n == n or tile_n % 8 == 0
    assert tile_c == c or tile_c % 128 == 0

    n_row_tiles = pl.cdiv(n, tile_n)
    n_cls_tiles = pl.cdiv(c, tile_c)   # class (reduction) axis last

    kernel = functools.partial(
        _label_smoothing_kernel,
        n_total=n, classes=classes, smoothing=float(smoothing),
        tile_n=tile_n, tile_c=tile_c,
        ragged_rows=(n % tile_n != 0), ragged_cols=(c % tile_c != 0))

    tgt2d = target.astype(jnp.int32).reshape(n, 1)

    partials = pl.pallas_call(
        kernel,
        out_shape=jax.ShapeDtypeStruct((n_row_tiles * 8, 128), jnp.float32),
        grid=(n_row_tiles, n_cls_tiles),
        in_specs=[
            pl.BlockSpec((tile_n, tile_c), lambda i, j: (i, j)),   # pred tile
            pl.BlockSpec((tile_n, 1), lambda i, j: (i, 0)),        # target tile
        ],
        out_specs=pl.BlockSpec((8, 128), lambda i, j: (i, 0)),     # per-row-tile partial
        compiler_params=pltpu.CompilerParams(
            dimension_semantics=("parallel", "arbitrary"),
            vmem_limit_bytes=48 << 20),
    )(pred, tgt2d)

    # Tiny epilogue in JAX: cross-row-tile sum, negation, global 1/N.
    return -jnp.sum(partials) / n


def _reference(pred, target, classes, smoothing):
    pred = pred.astype(jnp.float32)
    confidence = 1.0 - smoothing
    true_dist = jnp.full(pred.shape, smoothing / (classes - 1), jnp.float32)
    true_dist = true_dist.at[jnp.arange(pred.shape[0]), target].set(confidence)
    return jnp.mean(jnp.sum(-true_dist * pred, axis=-1))


if __name__ == "__main__":
    key = jax.random.PRNGKey(0)
    k1, k2, k3, k4, k5, k6 = jax.random.split(key, 6)

    # Test 1: ragged row tiles (N=24, tile_n=16 -> last tile masked), narrow C.
    N, C, sm = 24, 32, 0.1
    pred = jax.nn.log_softmax(jax.random.normal(k1, (N, C), jnp.float32), axis=-1)
    tgt = jax.random.randint(k2, (N,), 0, C, dtype=jnp.int32)
    loss = jax.block_until_ready(
        label_smoothing_loss(pred, tgt, classes=C, smoothing=sm, tile_n=16))
    ref = _reference(pred, tgt, C, sm)
    assert jnp.allclose(loss, ref, rtol=1e-5, atol=1e-5), (loss, ref)

    # Test 2: both axes tiled and ragged (row + class edge masking, multi-step
    # class reduction, 3 parallel row tiles).
    N2, C2, sm2 = 40, 160, 0.2
    pred2 = jax.nn.log_softmax(jax.random.normal(k3, (N2, C2), jnp.float32), axis=-1)
    tgt2 = jax.random.randint(k4, (N2,), 0, C2, dtype=jnp.int32)
    loss2 = jax.block_until_ready(
        label_smoothing_loss(pred2, tgt2, classes=C2, smoothing=sm2,
                             tile_n=16, tile_c=128))
    ref2 = _reference(pred2, tgt2, C2, sm2)
    assert jnp.allclose(loss2, ref2, rtol=1e-5, atol=1e-5), (loss2, ref2)

    # Test 3: bfloat16 pred (halves HBM read traffic; upcast inside the kernel).
    pred3 = pred2.astype(jnp.bfloat16)
    loss3 = jax.block_until_ready(
        label_smoothing_loss(pred3, tgt2, classes=C2, smoothing=sm2,
                             tile_n=16, tile_c=128))
    ref3 = _reference(pred3, tgt2, C2, sm2)
    assert jnp.allclose(loss3, ref3, rtol=1e-4, atol=1e-4), (loss3, ref3)

    # Test 4: exactly divisible shapes + default tile selection -> statically
    # mask-free fast path.
    N4, C4, sm4 = 64, 256, 0.05
    pred4 = jax.nn.log_softmax(jax.random.normal(k5, (N4, C4), jnp.float32), axis=-1)
    tgt4 = jax.random.randint(k6, (N4,), 0, C4, dtype=jnp.int32)
    loss4 = jax.block_until_ready(
        label_smoothing_loss(pred4, tgt4, classes=C4, smoothing=sm4))
    ref4 = _reference(pred4, tgt4, C4, sm4)
    assert jnp.allclose(loss4, ref4, rtol=1e-5, atol=1e-5), (loss4, ref4)

    print("KERNEL_OK")
</pallas_src>

<mosaic_0001>
module attributes {stable_mosaic.version = 11 : i64} {
  func.func @_label_smoothing_kernel(%arg0: i32, %arg1: i32, %arg2: memref<16x32xf32, #tpu.memory_space<vmem>>, %arg3: memref<16x1xi32, #tpu.memory_space<vmem>>, %arg4: memref<8x128xf32, #tpu.memory_space<vmem>>) attributes {dimension_semantics = [#tpu.dimension_semantics<parallel>, #tpu.dimension_semantics<arbitrary>], iteration_bounds = array<i64: 2, 1>, scalar_prefetch = 0 : i64, scratch_operands = 0 : i64, tpu.core_type = #tpu.core_type<tc>, window_params = [{transform_indices = @transform_0, window_bounds = array<i64: 16, 32>}, {transform_indices = @transform_1, window_bounds = array<i64: 16, 1>}, {transform_indices = @transform_2, window_bounds = array<i64: 8, 128>}]} {
    %c0_i32 = arith.constant 0 : i32
    %0 = arith.cmpi eq, %arg1, %c0_i32 : i32
    %1 = arith.extui %0 : i1 to i32
    %c0_i32_0 = arith.constant 0 : i32
    %2 = arith.cmpi ne, %1, %c0_i32_0 : i32
    scf.if %2 {
      %cst = arith.constant 0.000000e+00 : f32
      %11 = vector.broadcast %cst : f32 to vector<8x128xf32>
      %c0_6 = arith.constant 0 : index
      %c0_7 = arith.constant 0 : index
      %12 = vector.load %arg4[%c0_6, %c0_7] : memref<8x128xf32, #tpu.memory_space<vmem>>, vector<8x128xf32>
      tpu.vector_store %arg4[%c0_6, %c0_7], %11 {strides = array<i32>} : memref<8x128xf32, #tpu.memory_space<vmem>>, vector<8x128xf32>,
    } else {
    }
    %c0 = arith.constant 0 : index
    %c0_1 = arith.constant 0 : index
    %3 = vector.load %arg2[%c0, %c0_1] : memref<16x32xf32, #tpu.memory_space<vmem>>, vector<16x32xf32>
    %c0_2 = arith.constant 0 : index
    %c0_3 = arith.constant 0 : index
    %4 = vector.load %arg3[%c0_2, %c0_3] : memref<16x1xi32, #tpu.memory_space<vmem>>, vector<16x1xi32>
    %c1_i32 = arith.constant 1 : i32
    %5 = arith.cmpi eq, %arg0, %c1_i32 : i32
    %true = arith.constant true
    %6 = arith.xori %5, %true : i1
    %7 = arith.extui %6 : i1 to i32
    %c0_i32_4 = arith.constant 0 : i32
    %8 = arith.cmpi ne, %7, %c0_i32_4 : i32
    scf.if %8 {
      %11 = tpu.iota {dimensions = array<i32: 1>} : vector<16x32xi32>
      %c32_i32 = arith.constant 32 : i32
      %12 = arith.muli %arg1, %c32_i32 : i32
      %13 = vector.broadcast %12 : i32 to vector<16x1xi32>
      %14 = arith.subi %4, %13 : vector<16x1xi32>
      %15 = vector.broadcast %14 : vector<16x1xi32> to vector<16x32xi32>
      %16 = arith.cmpi eq, %11, %15 : vector<16x32xi32>
      %cst = arith.constant 0.000000e+00 : f32
      %17 = vector.broadcast %cst : f32 to vector<16x32xf32>
      %18 = arith.select %16, %3, %17 : vector<16x32xi1>, vector<16x32xf32>
      %19 = vector.shape_cast %3 : vector<16x32xf32> to vector<1x16x32xf32>
      %cst_6 = arith.constant dense<0.000000e+00> : vector<1xf32>
      %20 = vector.multi_reduction <add>, %19, %cst_6 [1, 2] : vector<1x16x32xf32> to vector<1xf32>
      %21 = vector.shape_cast %20 : vector<1xf32> to vector<1x1x1xf32>
      %22 = vector.extract %21[0, 0, 0] : f32 from vector<1x1x1xf32>
      %cst_7 = arith.constant 0.0032258064 : f32
      %23 = arith.mulf %cst_7, %22 : f32
      %24 = vector.shape_cast %18 : vector<16x32xf32> to vector<1x16x32xf32>
      %cst_8 = arith.constant dense<0.000000e+00> : vector<1xf32>
      %25 = vector.multi_reduction <add>, %24, %cst_8 [1, 2] : vector<1x16x32xf32> to vector<1xf32>
      %26 = vector.shape_cast %25 : vector<1xf32> to vector<1x1x1xf32>
      %27 = vector.extract %26[0, 0, 0] : f32 from vector<1x1x1xf32>
      %cst_9 = arith.constant 0.896774172 : f32
      %28 = arith.mulf %cst_9, %27 : f32
      %29 = arith.addf %23, %28 : f32
      %c0_10 = arith.constant 0 : index
      %c0_11 = arith.constant 0 : index
      %30 = vector.load %arg4[%c0_10, %c0_11] : memref<8x128xf32, #tpu.memory_space<vmem>>, vector<1x1xf32>
      %31 = vector.broadcast %29 : f32 to vector<1x1xf32>
      %32 = arith.addf %30, %31 : vector<1x1xf32>
      %c0_12 = arith.constant 0 : index
      %c0_13 = arith.constant 0 : index
      %33 = vector.load %arg4[%c0_12, %c0_13] : memref<8x128xf32, #tpu.memory_space<vmem>>, vector<1x1xf32>
      tpu.vector_store %arg4[%c0_12, %c0_13], %32 {strides = array<i32>} : memref<8x128xf32, #tpu.memory_space<vmem>>, vector<1x1xf32>,
    } else {
    }
    %9 = arith.extui %5 : i1 to i32
    %c0_i32_5 = arith.constant 0 : i32
    %10 = arith.cmpi ne, %9, %c0_i32_5 : i32
    scf.if %10 {
      %11 = tpu.iota {dimensions = array<i32: 0>} : vector<16x1xi32>
      %c16_i32 = arith.constant 16 : i32
      %12 = arith.muli %arg0, %c16_i32 : i32
      %c24_i32 = arith.constant 24 : i32
      %13 = arith.subi %c24_i32, %12 : i32
      %14 = vector.broadcast %13 : i32 to vector<16x1xi32>
      %15 = arith.cmpi slt, %11, %14 : vector<16x1xi32>
      %cst = arith.constant 0.000000e+00 : f32
      %16 = vector.shape_cast %15 : vector<16x1xi1> to vector<16x1xi1>
      %17 = vector.broadcast %16 : vector<16x1xi1> to vector<16x32xi1>
      %18 = vector.broadcast %cst : f32 to vector<16x32xf32>
      %19 = arith.select %17, %3, %18 : vector<16x32xi1>, vector<16x32xf32>
      %20 = tpu.iota {dimensions = array<i32: 1>} : vector<16x32xi32>
      %c32_i32 = arith.constant 32 : i32
      %21 = arith.muli %arg1, %c32_i32 : i32
      %22 = vector.broadcast %21 : i32 to vector<16x1xi32>
      %23 = arith.subi %4, %22 : vector<16x1xi32>
      %24 = vector.broadcast %23 : vector<16x1xi32> to vector<16x32xi32>
      %25 = arith.cmpi eq, %20, %24 : vector<16x32xi32>
      %cst_6 = arith.constant 0.000000e+00 : f32
      %26 = vector.broadcast %cst_6 : f32 to vector<16x32xf32>
      %27 = arith.select %25, %19, %26 : vector<16x32xi1>, vector<16x32xf32>
      %28 = vector.shape_cast %19 : vector<16x32xf32> to vector<1x16x32xf32>
      %cst_7 = arith.constant dense<0.000000e+00> : vector<1xf32>
      %29 = vector.multi_reduction <add>, %28, %cst_7 [1, 2] : vector<1x16x32xf32> to vector<1xf32>
      %30 = vector.shape_cast %29 : vector<1xf32> to vector<1x1x1xf32>
      %31 = vector.extract %30[0, 0, 0] : f32 from vector<1x1x1xf32>
      %cst_8 = arith.constant 0.0032258064 : f32
      %32 = arith.mulf %cst_8, %31 : f32
      %33 = vector.shape_cast %27 : vector<16x32xf32> to vector<1x16x32xf32>
      %cst_9 = arith.constant dense<0.000000e+00> : vector<1xf32>
      %34 = vector.multi_reduction <add>, %33, %cst_9 [1, 2] : vector<1x16x32xf32> to vector<1xf32>
      %35 = vector.shape_cast %34 : vector<1xf32> to vector<1x1x1xf32>
      %36 = vector.extract %35[0, 0, 0] : f32 from vector<1x1x1xf32>
      %cst_10 = arith.constant 0.896774172 : f32
      %37 = arith.mulf %cst_10, %36 : f32
      %38 = arith.addf %32, %37 : f32
      %c0_11 = arith.constant 0 : index
      %c0_12 = arith.constant 0 : index
      %39 = vector.load %arg4[%c0_11, %c0_12] : memref<8x128xf32, #tpu.memory_space<vmem>>, vector<1x1xf32>
      %40 = vector.broadcast %38 : f32 to vector<1x1xf32>
      %41 = arith.addf %39, %40 : vector<1x1xf32>
      %c0_13 = arith.constant 0 : index
      %c0_14 = arith.constant 0 : index
      %42 = vector.load %arg4[%c0_13, %c0_14] : memref<8x128xf32, #tpu.memory_space<vmem>>, vector<1x1xf32>
      tpu.vector_store %arg4[%c0_13, %c0_14], %41 {strides = array<i32>} : memref<8x128xf32, #tpu.memory_space<vmem>>, vector<1x1xf32>,
    } else {
    }
    return
  }
  func.func @transform_0(%arg0: i32, %arg1: i32) -> (i32, i32) {
    %c0_i32 = arith.constant 0 : i32
    return %arg0, %arg1 : i32, i32
  }
  func.func @transform_1(%arg0: i32, %arg1: i32) -> (i32, i32) {
    %c0_i32 = arith.constant 0 : i32
    %c0_i32_0 = arith.constant 0 : i32
    return %arg0, %c0_i32 : i32, i32
  }
  func.func @transform_2(%arg0: i32, %arg1: i32) -> (i32, i32) {
    %c0_i32 = arith.constant 0 : i32
    %c0_i32_0 = arith.constant 0 : i32
    return %arg0, %c0_i32 : i32, i32
  }
}

</mosaic_0001>

<llo_original>
// kernel: tpu_custom_call.1
$region0: #{tpu_custom_call.1}
  #allocation0 [shape = 'u32[]', space=smem, size = 0x4, offset = 0x4, fixed_abs, tag = 'smem constant byte address 0x4 - core index']
  #allocation1 [shape = 'u32[144,128]{1,0:T(1,128)}', space=vmem, size = 0x12000, scoped, tag = 'internal scratch']
  %s0 = inlined_call_operand.vmem [shape: f32[24,32], index: 0, kind: input, shape index: {}]
  %s1 = inlined_call_operand.vmem [shape: s32[24,1], index: 1, kind: input, shape index: {}]
  %s2 = inlined_call_operand.hbm [shape: f32[16,128], index: 2, kind: output, shape index: {}]
  %s3 = sld [smem:[#allocation0]]
  $region53: #{tpu_custom_call.1} parent=0
    _
  %s5 = ssub.s32 1, %s3
  %s6 = scalar_select 0, %s5, %s3
  $region1: #{tpu_custom_call.1} parent=0
    #allocation2 [shape = 'u8[8192]{0}', space=vmem, size = 0x2000, scoped, tag = 'output window, operand 0']
    #allocation3 [shape = 's32[2]{0}', space=sflag, size = 0x8, scoped, tag = 'scoped memory for tpu_custom_call.1']
    %7 = vsyncpa [#allocation3], 0
    %s8 = scalar_lea.sflag [#allocation3], 1
    %9 = vsyncpa %s8, 0
    loop: start=0, step=1, limit=4
    $region2: #{tpu_custom_call.1} parent=1 // loop_pre_header
      _
    $region3: #{tpu_custom_call.1} parent=1 // loop_header
      %s11 = sphi 0, %s15
      %p12 = scmp.ge.s32.totalorder %s11, 4
      %s18 = sphi 0, %s30
      %s19 = sphi 0, %s26
      %s20 = sphi 0, %s18
      %s21 = sphi 0, %s19
      %s22 = sphi 0, %s20
      %s23 = sphi 0, %s21
      %s35 = sphi 0, %s37
      %s38 = sphi 0, %s35
      %s39 = sphi 0, %s38
      %s55 = sphi 0, %s39
      %s61 = sphi 0, %s63
      %s64 = sphi 0, %s61
      %s65 = sphi 0, %s64
      %s81 = sphi 0, %s65
      %s87 = sphi 0, %s89
      %s90 = sphi 0, %s87
      %s91 = sphi 0, %s90
      %s107 = sphi 0, %s91
    $region4: #{tpu_custom_call.1} parent=1 // loop_header_branch
      %14 = sbr.rel (%p12) target = $region8
    $region5: #{tpu_custom_call.1} parent=1 // loop_body
      %s16 = ssub.s32 %s11, 1
      %s17 = ssub.s32 %s11, 2
      %s24 = sadd.s32 1, %s19
      %p25 = scmp.ge.s32.totalorder %s24, 1
      %s26 = scalar_select %p25, 0, %s24
      %s27 = sadd.s32 1, %s18
      %s28 = scalar_select %p25, %s27, %s18
      %p29 = scmp.ge.s32.totalorder %s28, 2
      %s30 = scalar_select %p29, 0, %s28
      %s31 = ssub.s32 %s18, %s30
      %s32 = ssub.s32 %s19, %s26
      %s33 = sor.u32 %s31, %s32
      %p34 = scmp.eq.s32.totalorder %s33, 0
      %s36 = sadd.s32 %s35, 1
      %s37 = scalar_select %p34, %s35, %s36
      %p40 = pneg %p34
      %p41 = scmp.eq.s32.totalorder %s11, 1
      %p42 = por %p40, %p41
      %p43 = scmp.ne.s32.totalorder %s35, %s38
      %p44 = scmp.eq.s32.totalorder %s11, 0
      %p45 = por %p43, %p44
      %p46 = scmp.ne.s32.totalorder %s35, %s38
      %p47 = scmp.eq.s32.totalorder %s16, 1
      %p48 = por %p46, %p47
      %p49 = scmp.ne.s32.totalorder %s38, %s39
      %p50 = scmp.eq.s32.totalorder %s16, 0
      %p51 = por %p49, %p50
      %p52 = scmp.ne.s32.totalorder %s38, %s39
      %p53 = scmp.eq.s32.totalorder %s17, 1
      %p54 = por %p52, %p53
      %p56 = scmp.ne.s32.totalorder %s39, %s55
      %p57 = scmp.eq.s32.totalorder %s17, 0
      %p58 = por %p56, %p57
      %s59 = ssub.s32 %s18, %s30
      %p60 = scmp.eq.s32.totalorder %s59, 0
      %s62 = sadd.s32 %s61, 1
      %s63 = scalar_select %p60, %s61, %s62
      %p66 = pneg %p60
      %p67 = scmp.eq.s32.totalorder %s11, 1
      %p68 = por %p66, %p67
      %p69 = scmp.ne.s32.totalorder %s61, %s64
      %p70 = scmp.eq.s32.totalorder %s11, 0
      %p71 = por %p69, %p70
      %p72 = scmp.ne.s32.totalorder %s61, %s64
      %p73 = scmp.eq.s32.totalorder %s16, 1
      %p74 = por %p72, %p73
      %p75 = scmp.ne.s32.totalorder %s64, %s65
      %p76 = scmp.eq.s32.totalorder %s16, 0
      %p77 = por %p75, %p76
      %p78 = scmp.ne.s32.totalorder %s64, %s65
      %p79 = scmp.eq.s32.totalorder %s17, 1
      %p80 = por %p78, %p79
      %p82 = scmp.ne.s32.totalorder %s65, %s81
      %p83 = scmp.eq.s32.totalorder %s17, 0
      %p84 = por %p82, %p83
      %s85 = ssub.s32 %s18, %s30
      %p86 = scmp.eq.s32.totalorder %s85, 0
      %s88 = sadd.s32 %s87, 1
      %s89 = scalar_select %p86, %s87, %s88
      %p92 = pneg %p86
      %p93 = scmp.eq.s32.totalorder %s11, 1
      %p94 = por %p92, %p93
      %p95 = scmp.ne.s32.totalorder %s87, %s90
      %p96 = scmp.eq.s32.totalorder %s11, 0
      %p97 = por %p95, %p96
      %p98 = scmp.ne.s32.totalorder %s87, %s90
      %p99 = scmp.eq.s32.totalorder %s16, 1
      %p100 = por %p98, %p99
      %p101 = scmp.ne.s32.totalorder %s90, %s91
      %p102 = scmp.eq.s32.totalorder %s16, 0
      %p103 = por %p101, %p102
      %p104 = scmp.ne.s32.totalorder %s90, %s91
      %p105 = scmp.eq.s32.totalorder %s17, 1
      %p106 = por %p104, %p105
      %p108 = scmp.ne.s32.totalorder %s91, %s107
      %p109 = scmp.eq.s32.totalorder %s17, 0
      %p110 = por %p108, %p109
      %p111 = scmp.le.s32.totalorder 1, %s11
      %p112 = scmp.lt.s32.totalorder %s11, 3
      %p113 = pnand %p111, %p112
      %p114 = pneg %p113
      // Predicated region
      $region9: #{tpu_custom_call.1} parent=5 // pred_check
        _
      $region10: #{tpu_custom_call.1} parent=5 // pred_check_branch
        %116 = sbr.rel (%p113) target = $region12
      $region11: #{tpu_custom_call.1} parent=5 // pred_region
        %s117 = ssub.s32 %s11, 1
      $region12: #{tpu_custom_call.1} parent=5 // pred_fallthru
        _
      %p118 = scmp.lt.s32.totalorder %s11, 2
      // Predicated region
      $region13: #{tpu_custom_call.1} parent=5 // pred_check
        %p119 = pneg %p118
      $region14: #{tpu_custom_call.1} parent=5 // pred_check_branch
        %121 = sbr.rel (%p119) target = $region16
      $region15: #{tpu_custom_call.1} parent=5 // pred_region
        // Predicated region
        $region17: #{tpu_custom_call.1} parent=15 // pred_check
          %p122 = pneg %p45
        $region18: #{tpu_custom_call.1} parent=15 // pred_check_branch
          %124 = sbr.rel (%p122) target = $region20
        $region19: #{tpu_custom_call.1} parent=15 // pred_region
          %s125 = smul.u32 2, %s18
          %s126 = ssub.s32 3, %s125
          %p127 = scmp.lt.s32.totalorder %s126, 2
          %s128 = scalar_select %p127, %s126, 2
          %s129 = smul.u32 128, %s128
          %p130 = scmp.lt.s32.totalorder %s125, 2
          %s131 = scalar_select %p130, %s125, 2
          %p132 = scmp.lt.s32.totalorder %s19, 0
          %s133 = scalar_select %p132, %s19, 0
          %s134 = sadd.s32 %s133, %s131
          %s135 = smul.addr %s134, 8
          %s136 = scalar_lea.vmem %s0, %s135
          %s137 = smul.u32 2, %s18
          %s138 = ssub.s32 3, %s137
          %p139 = scmp.lt.s32.totalorder %s138, 2
          %s140 = scalar_select %p139, %s138, 2
          %s141 = smul.u32 128, %s140
        $region20: #{tpu_custom_call.1} parent=15 // pred_fallthru
          _
        // Predicated region
        $region21: #{tpu_custom_call.1} parent=15 // pred_check
          %p142 = pneg %p71
        $region22: #{tpu_custom_call.1} parent=15 // pred_check_branch
          %144 = sbr.rel (%p142) target = $region24
        $region23: #{tpu_custom_call.1} parent=15 // pred_region
          %s145 = smul.u32 2, %s18
          %s146 = ssub.s32 3, %s145
          %p147 = scmp.lt.s32.totalorder %s146, 2
          %s148 = scalar_select %p147, %s146, 2
          %s149 = smul.u32 128, %s148
          %p150 = scmp.lt.s32.totalorder %s145, 2
          %s151 = scalar_select %p150, %s145, 2
          %s152 = smul.addr %s151, 8
          %s153 = scalar_lea.vmem %s1, %s152
          %s154 = smul.u32 2, %s18
          %s155 = ssub.s32 3, %s154
          %p156 = scmp.lt.s32.totalorder %s155, 2
          %s157 = scalar_select %p156, %s155, 2
          %s158 = smul.u32 128, %s157
        $region24: #{tpu_custom_call.1} parent=15 // pred_fallthru
          _
      $region16: #{tpu_custom_call.1} parent=5 // pred_fallthru
        _
      %p159 = scmp.le.s32.totalorder 1, %s11
      %p160 = scmp.lt.s32.totalorder %s11, 3
      %p161 = pnand %p159, %p160
      %p162 = pneg %p161
      // Predicated region
      $region25: #{tpu_custom_call.1} parent=5 // pred_check
        _
      $region26: #{tpu_custom_call.1} parent=5 // pred_check_branch
        %164 = sbr.rel (%p161) target = $region28
      $region27: #{tpu_custom_call.1} parent=5 // pred_region
        %s165 = ssub.s32 %s11, 1
        %s166 = smul.u32 2, %s20
        %s167 = ssub.s32 3, %s166
        %p168 = scmp.lt.s32.totalorder %s167, 2
        %s169 = scalar_select %p168, %s167, 2
        %s170 = smul.u32 128, %s169
        %p171 = scmp.lt.s32.totalorder %s166, 2
        %s172 = scalar_select %p171, %s166, 2
        %p173 = scmp.lt.s32.totalorder %s21, 0
        %s174 = scalar_select %p173, %s21, 0
        %s175 = sadd.s32 %s174, %s172
        %s176 = smul.addr %s175, 8
        %s177 = scalar_lea.vmem %s0, %s176
        %p178 = pneg %p51
        %p179 = pneg %p48
        %s180 = smul.u32 2, %s20
        %s181 = ssub.s32 3, %s180
        %p182 = scmp.lt.s32.totalorder %s181, 2
        %s183 = scalar_select %p182, %s181, 2
        %s184 = smul.u32 128, %s183
        %p185 = scmp.lt.s32.totalorder %s180, 2
        %s186 = scalar_select %p185, %s180, 2
        %s187 = smul.addr %s186, 8
        %s188 = scalar_lea.vmem %s1, %s187
        %p189 = pneg %p77
        %p190 = pneg %p74
        %p191 = pneg %p103
        %p192 = pneg %p100
        %s193 = sand.u32 %s90, 1
        %s194 = scalar_lea.sflag [#allocation3], %s193
        %s195 = sand.u32 %s90, 1
        %s196 = smul.addr %s195, 8
        %s197 = scalar_lea.vmem [#allocation2], %s196
        %s198 = smul.u32 2, %s20
        %s199 = ssub.s32 3, %s198
        %p200 = scmp.lt.s32.totalorder %s199, 2
        %s201 = scalar_select %p200, %s199, 2
        %s202 = smul.u32 128, %s201
        %p203 = scmp.lt.s32.totalorder %s198, 2
        %s204 = scalar_select %p203, %s198, 2
        %p205 = scmp.lt.s32.totalorder %s21, 0
        %s206 = scalar_select %p205, %s21, 0
        %s207 = sadd.s32 %s206, %s204
        %s208 = smul.addr %s207, 8
        %s209 = scalar_lea.vmem %s0, %s208
        %s210 = smul.u32 2, %s20
        %s211 = ssub.s32 3, %s210
        %p212 = scmp.lt.s32.totalorder %s211, 2
        %s213 = scalar_select %p212, %s211, 2
        %s214 = smul.u32 128, %s213
        %s215 = smul.u32 2, %s20
        %s216 = ssub.s32 3, %s215
        %p217 = scmp.lt.s32.totalorder %s216, 2
        %s218 = scalar_select %p217, %s216, 2
        %s219 = smul.u32 128, %s218
        %p220 = scmp.lt.s32.totalorder %s215, 2
        %s221 = scalar_select %p220, %s215, 2
        %s222 = smul.addr %s221, 8
        %s223 = scalar_lea.vmem %s1, %s222
        %s224 = smul.u32 2, %s20
        %s225 = ssub.s32 3, %s224
        %p226 = scmp.lt.s32.totalorder %s225, 2
        %s227 = scalar_select %p226, %s225, 2
        %s228 = smul.u32 128, %s227
        %p229 = scmp.eq.s32.totalorder %s21, 0
        // Predicated region
        $region29: #{tpu_custom_call.1} parent=27 // pred_check
          %p230 = pneg %p229
        $region30: #{tpu_custom_call.1} parent=27 // pred_check_branch
          %232 = sbr.rel (%p230) target = $region32
        $region31: #{tpu_custom_call.1} parent=27 // pred_region
          %233 = vst [vmem:[%s197] sm:$0xff] 0.0
        $region32: #{tpu_custom_call.1} parent=27 // pred_fallthru
          _
        %v234 = vld [vmem:[%s209] sm:$0xff]
        %v235 = vld [vmem:[%s209 + $0x8] sm:$0xff]
        %v236 = vld [vmem:[%s223] sm:$0xff]
        %v237 = vld [vmem:[%s223 + $0x8] sm:$0xff]
        %p238 = scmp.eq.s32.totalorder %s20, 1
        %p239 = scmp.ne.s32.totalorder %s20, 1
        // Predicated region
        $region33: #{tpu_custom_call.1} parent=27 // pred_check
          %p240 = pneg %p239
        $region34: #{tpu_custom_call.1} parent=27 // pred_check_branch
          %242 = sbr.rel (%p240) target = $region36
        $region35: #{tpu_custom_call.1} parent=27 // pred_region
          %v243 = vlaneseq
          %v244 = vand.u32 %v243, 127
          %s245 = smul.u32 %s21, 32
          %v246 = vstv %s245
          %v247 = vsub.s32 %v236, %v246
          %v248 = vsub.s32 %v237, %v246
          %249 = vset.pattern.permute.xlu0 0
          %250 = vperm.xlu0 %249, %v247
          %v251 = vpop.permute.xlu0 %250
          %252 = vset.pattern.permute.xlu0 0
          %253 = vperm.xlu0 %252, %v248
          %v254 = vpop.permute.xlu0 %253
          %vm255 = vcmp.eq.s32.totalorder %v244, %v251
          %vm256 = vcmp.eq.s32.totalorder %v244, %v254
          %v257 = vsel %vm255, %v234, 0.0
          %v258 = vsel %vm256, %v235, 0.0
          %vm259 = vcmask 261120
          %v260 = vsel %vm259, %v234, 0.0
          %v261 = vsel %vm259, %v235, 0.0
          %v262 = vadd.f32 %v260, %v261
          %263 = vadd.xlane.f32.xlu0 %v262
          %v264 = vpop.xlane.xlu0 %263
          %v265 = vrot.slane %v264, 4
          %v266 = vadd.f32 %v264, %v265
          %v267 = vrot.slane %v266, 2
          %v268 = vadd.f32 %v266, %v267
          %v269 = vrot.slane %v268, 1
          %v270 = vadd.f32 %v268, %v269
          %s271 = vtos %v270
          %s272 = smul.f32 %s271, 0.0032258064
          %v273 = vsel %vm259, %v257, 0.0
          %v274 = vsel %vm259, %v258, 0.0
          %v275 = vadd.f32 %v273, %v274
          %276 = vadd.xlane.f32.xlu0 %v275
          %v277 = vpop.xlane.xlu0 %276
          %v278 = vrot.slane %v277, 4
          %v279 = vadd.f32 %v277, %v278
          %v280 = vrot.slane %v279, 2
          %v281 = vadd.f32 %v279, %v280
          %v282 = vrot.slane %v281, 1
          %v283 = vadd.f32 %v281, %v282
          %s284 = vtos %v283
          %s285 = smul.f32 %s284, 0.8967742
          %s286 = sadd.f32 %s272, %s285
          %v287 = vld [vmem:[%s197] sm:$0x1]
          %v288 = vstv %s286
          %v289 = vadd.f32 %v287, %v288
          %vm290 = vcmask 0
          %291 = vst.msk [vmem:[%s197] sm:$0x1] %vm290, %v289
        $region36: #{tpu_custom_call.1} parent=27 // pred_fallthru
          _
        // Predicated region
        $region37: #{tpu_custom_call.1} parent=27 // pred_check
          %p292 = pneg %p238
        $region38: #{tpu_custom_call.1} parent=27 // pred_check_branch
          %294 = sbr.rel (%p292) target = $region40
        $region39: #{tpu_custom_call.1} parent=27 // pred_region
          %v295 = vlaneseq
          %v296 = vshrl.u32 %v295, 7
          %v297 = vadd.s32 %v296, 8
          %s298 = smul.u32 %s20, 16
          %s299 = ssub.s32 24, %s298
          %v300 = vstv %s299
          %vm301 = vcmp.lt.s32.totalorder %v296, %v300
          %vm302 = vcmp.lt.s32.totalorder %v297, %v300
          %v303 = vsel %vm301, 1, 0
          %v304 = vsel %vm302, 1, 0
          %vm305 = vcmp.eq.s32.totalorder %v303, 1
          %vm306 = vcmp.eq.s32.totalorder %v304, 1
          %v307 = vsel %vm305, %v234, 0.0
          %v308 = vsel %vm306, %v235, 0.0
          %v309 = vlaneseq
          %v310 = vand.u32 %v309, 127
          %s311 = smul.u32 %s21, 32
          %v312 = vstv %s311
          %v313 = vsub.s32 %v236, %v312
          %v314 = vsub.s32 %v237, %v312
          %315 = vset.pattern.permute.xlu0 0
          %316 = vperm.xlu0 %315, %v313
          %v317 = vpop.permute.xlu0 %316
          %318 = vset.pattern.permute.xlu0 0
          %319 = vperm.xlu0 %318, %v314
          %v320 = vpop.permute.xlu0 %319
          %vm321 = vcmp.eq.s32.totalorder %v310, %v317
          %vm322 = vcmp.eq.s32.totalorder %v310, %v320
          %v323 = vsel %vm321, %v307, 0.0
          %v324 = vsel %vm322, %v308, 0.0
          %vm325 = vcmask 261120
          %v326 = vsel %vm325, %v307, 0.0
          %v327 = vsel %vm325, %v308, 0.0
          %v328 = vadd.f32 %v326, %v327
          %329 = vadd.xlane.f32.xlu0 %v328
          %v330 = vpop.xlane.xlu0 %329
          %v331 = vrot.slane %v330, 4
          %v332 = vadd.f32 %v330, %v331
          %v333 = vrot.slane %v332, 2
          %v334 = vadd.f32 %v332, %v333
          %v335 = vrot.slane %v334, 1
          %v336 = vadd.f32 %v334, %v335
          %s337 = vtos %v336
          %s338 = smul.f32 %s337, 0.0032258064
          %v339 = vsel %vm325, %v323, 0.0
          %v340 = vsel %vm325, %v324, 0.0
          %v341 = vadd.f32 %v339, %v340
          %342 = vadd.xlane.f32.xlu0 %v341
          %v343 = vpop.xlane.xlu0 %342
          %v344 = vrot.slane %v343, 4
          %v345 = vadd.f32 %v343, %v344
          %v346 = vrot.slane %v345, 2
          %v347 = vadd.f32 %v345, %v346
          %v348 = vrot.slane %v347, 1
          %v349 = vadd.f32 %v347, %v348
          %s350 = vtos %v349
          %s351 = smul.f32 %s350, 0.8967742
          %s352 = sadd.f32 %s338, %s351
          %v353 = vld [vmem:[%s197] sm:$0x1]
          %v354 = vstv %s352
          %v355 = vadd.f32 %v353, %v354
          %vm356 = vcmask 0
          %357 = vst.msk [vmem:[%s197] sm:$0x1] %vm356, %v355
        $region40: #{tpu_custom_call.1} parent=27 // pred_fallthru
          _
        %s358 = sand.u32 %s90, 1
        %s359 = scalar_lea.sflag [#allocation3], %s358
        %s360 = sand.u32 %s90, 1
        %s361 = smul.addr %s360, 8
        %s362 = scalar_lea.vmem [#allocation2], %s361
        // Predicated region
        $region41: #{tpu_custom_call.1} parent=27 // pred_check
          %p363 = pneg %p100
        $region42: #{tpu_custom_call.1} parent=27 // pred_check_branch
          %365 = sbr.rel (%p363) target = $region44
        $region43: #{tpu_custom_call.1} parent=27 // pred_region
          %s367 = ssub.s32 128, 128
          %368 = vsyncadd %s359, %s367
          %s369 = smul.addr %s20, 128
          %s370 = scalar_lea.hbm %s2, %s369
          %s372 = sshll.u32 %s362, 4
          %s373 = int_to_ptr.vmem [resolvable:$true] %s372
          %375 = dma.vmem_to_hbm [thread:$0]  %s373, 128, %s370, %s359
        $region44: #{tpu_custom_call.1} parent=27 // pred_fallthru
          _
      $region28: #{tpu_custom_call.1} parent=5 // pred_fallthru
        _
      %p376 = scmp.le.s32.totalorder 2, %s11
      // Predicated region
      $region45: #{tpu_custom_call.1} parent=5 // pred_check
        %p377 = pneg %p376
      $region46: #{tpu_custom_call.1} parent=5 // pred_check_branch
        %379 = sbr.rel (%p377) target = $region48
      $region47: #{tpu_custom_call.1} parent=5 // pred_region
        %s380 = ssub.s32 %s11, 2
        // Predicated region
        $region49: #{tpu_custom_call.1} parent=47 // pred_check
          %p381 = pneg %p106
        $region50: #{tpu_custom_call.1} parent=47 // pred_check_branch
          %383 = sbr.rel (%p381) target = $region52
        $region51: #{tpu_custom_call.1} parent=47 // pred_region
          %s384 = sand.u32 %s91, 1
          %s385 = scalar_lea.sflag [#allocation3], %s384
          %s386 = sand.u32 %s91, 1
          %s387 = smul.addr %s386, 8
          %s388 = scalar_lea.vmem [#allocation2], %s387
          %389 = dma.done %s385, 128
        $region52: #{tpu_custom_call.1} parent=47 // pred_fallthru
          _
      $region48: #{tpu_custom_call.1} parent=5 // pred_fallthru
        _
    $region6: #{tpu_custom_call.1} parent=1 // loop_footer
      %s15 = sadd.s32 1, %s11
    $region7: #{tpu_custom_call.1} parent=1 // loop_footer_branch
      %10 = sbr.rel target = $region3
    $region8: #{tpu_custom_call.1} parent=1 // loop_exit
      _
    %390 = vsyncpa [#allocation3], 1
    %s391 = scalar_lea.sflag [#allocation3], 1
    %392 = vsyncpa %s391, 1

</llo_original>
